<compile_context>
chip_gen: v5e
topology: v5e:2x2
jax: 0.10.0
libtpu: 0.0.40
codegen_flags: <defaults>
</compile_context>

<pallas_src>
import jax
import jax.numpy as jnp
from jax.experimental import pallas as pl
from jax.experimental.pallas import tpu as pltpu

_LANE = 128               # TPU vreg lane width
_DEFAULT_LANE_TILE = 512  # batch lanes per grid step (multiple of 128)


def mlp_kernel(x_ref, w1_ref, b1_ref, w2_ref, b2_ref, w3_ref, b3_ref, o_ref):
    x = x_ref[...]                                               # (1, T), batch on lanes
    # fc1: in_features == 1 -> outer product on the VPU (MXU would be <1% used).
    h1 = jnp.maximum(w1_ref[...] * x + b1_ref[...], 0.0)         # (10, T)
    # fc2: 10x10 contraction; single small MXU matmul with f32 accumulation.
    h2 = jnp.dot(w2_ref[...], h1, preferred_element_type=jnp.float32)
    h2 = jnp.maximum(h2 + b2_ref[...], 0.0)                      # (10, T)
    # fc3: out_features == 1 -> weighted sublane reduction (VPU mul + XLU sum).
    o_ref[...] = jnp.sum(w3_ref[...] * h2, axis=0, keepdims=True) + b3_ref[...]


def _round_up(n, m):
    return ((n + m - 1) // m) * m


def simple_nn_forward(x, params, *, lane_tile=_DEFAULT_LANE_TILE):
    """x: (batch, 1) float32 (PyTorch Linear layout). Returns (batch, 1)."""
    w1, b1 = params["w1"], params["b1"]
    w2, b2 = params["w2"], params["b2"]
    w3, b3 = params["w3"], params["b3"]

    batch = x.shape[0]
    # Put batch on the lane axis: (batch, 1) -> (1, batch); pad to a tile multiple.
    xt = x.reshape(1, batch)
    tile = lane_tile if batch >= lane_tile else _round_up(batch, _LANE)
    padded = _round_up(batch, tile)
    if padded != batch:
        xt = jnp.pad(xt, ((0, 0), (0, padded - batch)))

    def resident(a):
        # Full-array block, same block index every grid step -> stays in VMEM.
        return pl.BlockSpec(a.shape, lambda i: (0,) * a.ndim)

    out = pl.pallas_call(
        mlp_kernel,
        out_shape=jax.ShapeDtypeStruct((1, padded), jnp.float32),
        grid=(padded // tile,),
        in_specs=[
            pl.BlockSpec((1, tile), lambda i: (0, i)),   # x: streamed, lane-dense
            resident(w1), resident(b1),
            resident(w2), resident(b2),
            resident(w3), resident(b3),
        ],
        out_specs=pl.BlockSpec((1, tile), lambda i: (0, i)),  # lane-dense stores
        compiler_params=pltpu.CompilerParams(
            dimension_semantics=("parallel",),      # shard batch tiles across TCs (v7x)
            vmem_limit_bytes=32 * 1024 * 1024,      # tiny footprint; safe on 64 MiB v7x
        ),
    )(xt, w1, b1, w2, b2, w3, b3)

    return out[0, :batch].reshape(batch, 1)


# TODO(synk): the NFDE/ODE training loop that re-evaluates SimpleNN each step is
# outside this module's forward; fusing that loop into the kernel (weights held
# in VMEM scratch across iterations) is the remaining per-call-overhead win.


def init_params(key):
    """PyTorch-default-style init, stored in the kernel's feature-major layout."""
    k1, k2, k3, k4, k5, k6 = jax.random.split(key, 6)

    def u(k, shape, fan_in):
        bound = 1.0 / jnp.sqrt(jnp.float32(fan_in))
        return jax.random.uniform(k, shape, jnp.float32, -bound, bound)

    return {
        "w1": u(k1, (10, 1), 1),    # fc1.weight           (out, in)
        "b1": u(k2, (10, 1), 1),    # fc1.bias as column
        "w2": u(k3, (10, 10), 10),  # fc2.weight           (out, in)
        "b2": u(k4, (10, 1), 10),   # fc2.bias as column
        "w3": u(k5, (10, 1), 10),   # fc3.weight.T         (in, out)
        "b3": u(k6, (1, 1), 10),    # fc3.bias
    }


def reference_forward(x, p):
    """Pure-JAX reference matching torch semantics (x: (batch, 1))."""
    h1 = jnp.maximum(x @ p["w1"].T + p["b1"].T, 0.0)
    h2 = jnp.maximum(h1 @ p["w2"].T + p["b2"].T, 0.0)
    return h2 @ p["w3"] + p["b3"]


if __name__ == "__main__":
    key = jax.random.PRNGKey(0)
    kx, kp = jax.random.split(key)
    params = init_params(kp)

    # Small batch (pads to a single 128-lane tile, grid of 1).
    batch = 8
    x_small = jax.random.normal(kx, (batch, 1), jnp.float32)
    out_small = jax.block_until_ready(simple_nn_forward(x_small, params))
    ref_small = reference_forward(x_small, params)
    assert out_small.shape == (batch, 1)
    assert jnp.allclose(out_small, ref_small, atol=1e-5, rtol=1e-4)

    # Larger batch exercising the multi-step "parallel" grid + padding path.
    big = 1000
    x_big = jax.random.normal(kx, (big, 1), jnp.float32)
    out_big = jax.block_until_ready(simple_nn_forward(x_big, params))
    ref_big = reference_forward(x_big, params)
    assert out_big.shape == (big, 1)
    assert jnp.allclose(out_big, ref_big, atol=1e-5, rtol=1e-4)

    print("KERNEL_OK")
</pallas_src>

<mosaic_0001>
module attributes {stable_mosaic.version = 11 : i64} {
  func.func @mlp_kernel(%arg0: i32, %arg1: memref<1x128xf32, #tpu.memory_space<vmem>>, %arg2: memref<10x1xf32, #tpu.memory_space<vmem>>, %arg3: memref<10x1xf32, #tpu.memory_space<vmem>>, %arg4: memref<10x10xf32, #tpu.memory_space<vmem>>, %arg5: memref<10x1xf32, #tpu.memory_space<vmem>>, %arg6: memref<10x1xf32, #tpu.memory_space<vmem>>, %arg7: memref<1x1xf32, #tpu.memory_space<vmem>>, %arg8: memref<1x128xf32, #tpu.memory_space<vmem>>) attributes {dimension_semantics = [#tpu.dimension_semantics<parallel>], iteration_bounds = array<i64: 1>, scalar_prefetch = 0 : i64, scratch_operands = 0 : i64, tpu.core_type = #tpu.core_type<tc>, window_params = [{transform_indices = @transform_0, window_bounds = array<i64: 1, 128>}, {pipeline_mode = #tpu.pipeline_mode<synchronous>, transform_indices = @transform_1, window_bounds = array<i64: 10, 1>}, {pipeline_mode = #tpu.pipeline_mode<synchronous>, transform_indices = @transform_2, window_bounds = array<i64: 10, 1>}, {pipeline_mode = #tpu.pipeline_mode<synchronous>, transform_indices = @transform_3, window_bounds = array<i64: 10, 10>}, {pipeline_mode = #tpu.pipeline_mode<synchronous>, transform_indices = @transform_4, window_bounds = array<i64: 10, 1>}, {pipeline_mode = #tpu.pipeline_mode<synchronous>, transform_indices = @transform_5, window_bounds = array<i64: 10, 1>}, {pipeline_mode = #tpu.pipeline_mode<synchronous>, transform_indices = @transform_6, window_bounds = array<i64: 1, 1>}, {transform_indices = @transform_7, window_bounds = array<i64: 1, 128>}]} {
    %c0 = arith.constant 0 : index
    %c0_0 = arith.constant 0 : index
    %0 = vector.load %arg1[%c0, %c0_0] : memref<1x128xf32, #tpu.memory_space<vmem>>, vector<1x128xf32>
    %c0_1 = arith.constant 0 : index
    %c0_2 = arith.constant 0 : index
    %1 = vector.load %arg2[%c0_1, %c0_2] : memref<10x1xf32, #tpu.memory_space<vmem>>, vector<10x1xf32>
    %2 = vector.broadcast %1 : vector<10x1xf32> to vector<10x128xf32>
    %3 = vector.broadcast %0 : vector<1x128xf32> to vector<10x128xf32>
    %4 = arith.mulf %2, %3 : vector<10x128xf32>
    %c0_3 = arith.constant 0 : index
    %c0_4 = arith.constant 0 : index
    %5 = vector.load %arg3[%c0_3, %c0_4] : memref<10x1xf32, #tpu.memory_space<vmem>>, vector<10x1xf32>
    %6 = vector.broadcast %5 : vector<10x1xf32> to vector<10x128xf32>
    %7 = arith.addf %4, %6 : vector<10x128xf32>
    %cst = arith.constant 0.000000e+00 : f32
    %8 = vector.broadcast %cst : f32 to vector<10x128xf32>
    %9 = arith.maximumf %7, %8 : vector<10x128xf32>
    %c0_5 = arith.constant 0 : index
    %c0_6 = arith.constant 0 : index
    %10 = vector.load %arg4[%c0_5, %c0_6] : memref<10x10xf32, #tpu.memory_space<vmem>>, vector<10x10xf32>
    %cst_7 = arith.constant dense<0.000000e+00> : vector<10x128xf32>
    %11 = tpu.matmul %10, %9, %cst_7 {dimension_numbers = #tpu.dot_dimension_numbers<[1], [0], [0], [1], [0, 0, 1, 1], [], []>} : vector<10x10xf32>, vector<10x128xf32>, vector<10x128xf32> -> vector<10x128xf32>
    %c0_8 = arith.constant 0 : index
    %c0_9 = arith.constant 0 : index
    %12 = vector.load %arg5[%c0_8, %c0_9] : memref<10x1xf32, #tpu.memory_space<vmem>>, vector<10x1xf32>
    %13 = vector.broadcast %12 : vector<10x1xf32> to vector<10x128xf32>
    %14 = arith.addf %11, %13 : vector<10x128xf32>
    %cst_10 = arith.constant 0.000000e+00 : f32
    %15 = vector.broadcast %cst_10 : f32 to vector<10x128xf32>
    %16 = arith.maximumf %14, %15 : vector<10x128xf32>
    %c0_11 = arith.constant 0 : index
    %c0_12 = arith.constant 0 : index
    %17 = vector.load %arg6[%c0_11, %c0_12] : memref<10x1xf32, #tpu.memory_space<vmem>>, vector<10x1xf32>
    %18 = vector.broadcast %17 : vector<10x1xf32> to vector<10x128xf32>
    %19 = arith.mulf %18, %16 : vector<10x128xf32>
    %cst_13 = arith.constant dense<0.000000e+00> : vector<128xf32>
    %20 = vector.multi_reduction <add>, %19, %cst_13 [0] : vector<10x128xf32> to vector<128xf32>
    %21 = vector.shape_cast %20 : vector<128xf32> to vector<1x128xf32>
    %c0_14 = arith.constant 0 : index
    %c0_15 = arith.constant 0 : index
    %22 = vector.load %arg7[%c0_14, %c0_15] : memref<1x1xf32, #tpu.memory_space<vmem>>, vector<1x1xf32>
    %23 = vector.broadcast %22 : vector<1x1xf32> to vector<1x128xf32>
    %24 = arith.addf %21, %23 : vector<1x128xf32>
    %c0_16 = arith.constant 0 : index
    %c0_17 = arith.constant 0 : index
    %25 = vector.load %arg8[%c0_16, %c0_17] : memref<1x128xf32, #tpu.memory_space<vmem>>, vector<1x128xf32>
    tpu.vector_store %arg8[%c0_16, %c0_17], %24 {strides = array<i32>} : memref<1x128xf32, #tpu.memory_space<vmem>>, vector<1x128xf32>,
    return
  }
  func.func @transform_0(%arg0: i32) -> (i32, i32) {
    %c0_i32 = arith.constant 0 : i32
    %c0_i32_0 = arith.constant 0 : i32
    return %c0_i32, %arg0 : i32, i32
  }
  func.func @transform_1(%arg0: i32) -> (i32, i32) {
    %c0_i32 = arith.constant 0 : i32
    %c0_i32_0 = arith.constant 0 : i32
    %c0_i32_1 = arith.constant 0 : i32
    return %c0_i32, %c0_i32_0 : i32, i32
  }
  func.func @transform_2(%arg0: i32) -> (i32, i32) {
    %c0_i32 = arith.constant 0 : i32
    %c0_i32_0 = arith.constant 0 : i32
    %c0_i32_1 = arith.constant 0 : i32
    return %c0_i32, %c0_i32_0 : i32, i32
  }
  func.func @transform_3(%arg0: i32) -> (i32, i32) {
    %c0_i32 = arith.constant 0 : i32
    %c0_i32_0 = arith.constant 0 : i32
    %c0_i32_1 = arith.constant 0 : i32
    return %c0_i32, %c0_i32_0 : i32, i32
  }
  func.func @transform_4(%arg0: i32) -> (i32, i32) {
    %c0_i32 = arith.constant 0 : i32
    %c0_i32_0 = arith.constant 0 : i32
    %c0_i32_1 = arith.constant 0 : i32
    return %c0_i32, %c0_i32_0 : i32, i32
  }
  func.func @transform_5(%arg0: i32) -> (i32, i32) {
    %c0_i32 = arith.constant 0 : i32
    %c0_i32_0 = arith.constant 0 : i32
    %c0_i32_1 = arith.constant 0 : i32
    return %c0_i32, %c0_i32_0 : i32, i32
  }
  func.func @transform_6(%arg0: i32) -> (i32, i32) {
    %c0_i32 = arith.constant 0 : i32
    %c0_i32_0 = arith.constant 0 : i32
    %c0_i32_1 = arith.constant 0 : i32
    return %c0_i32, %c0_i32_0 : i32, i32
  }
  func.func @transform_7(%arg0: i32) -> (i32, i32) {
    %c0_i32 = arith.constant 0 : i32
    %c0_i32_0 = arith.constant 0 : i32
    return %c0_i32, %arg0 : i32, i32
  }
}

</mosaic_0001>

<llo_original>
// kernel: tpu_custom_call.1
$region0: #{tpu_custom_call.1}
  #allocation0 [shape = 'u32[]', space=smem, size = 0x4, offset = 0x4, fixed_abs, tag = 'smem constant byte address 0x4 - core index']
  #allocation1 [shape = 'u32[72,128]{1,0:T(1,128)}', space=vmem, size = 0x9000, scoped, tag = 'internal scratch']
  #allocation2 [shape = 'f32[1,1]{1,0:T(1,128)S(1)}', space=vmem, size = 0x200, scoped, tag = 'scoped memory for tpu_custom_call.1']
  %s0 = inlined_call_operand.vmem [shape: f32[1,128], index: 0, kind: input, shape index: {}]
  %s1 = inlined_call_operand.vmem [shape: f32[10,1], index: 1, kind: input, shape index: {}]
  %s2 = inlined_call_operand.vmem [shape: f32[10,1], index: 2, kind: input, shape index: {}]
  %s3 = inlined_call_operand.vmem [shape: f32[10,10], index: 3, kind: input, shape index: {}]
  %s4 = inlined_call_operand.vmem [shape: f32[10,1], index: 4, kind: input, shape index: {}]
  %s5 = inlined_call_operand.vmem [shape: f32[10,1], index: 5, kind: input, shape index: {}]
  %s6 = inlined_call_operand.<no memory space> [shape: f32[1,1], index: 6, kind: input, shape index: {}]
  %s7 = inlined_call_operand.hbm [shape: f32[1,128], index: 7, kind: output, shape index: {}]
  %s8 = sld [smem:[#allocation0]]
  $region38: #{tpu_custom_call.1} parent=0
    _
  %s10 = ssub.s32 1, %s8
  %s11 = scalar_select 0, %s10, %s8
  %v12 = vstv %s6
  %13 = vst [vmem:[#allocation2] sm:$0x1] %v12
  $region1: #{tpu_custom_call.1} parent=0
    #allocation3 [shape = 'u8[512]{0}', space=vmem, size = 0x400, scoped, tag = 'output window, operand 0, single buffered']
    #allocation4 [shape = 's32[1]{0}', space=sflag, size = 0x4, scoped, tag = 'scoped memory for tpu_custom_call.1']
    %14 = vsyncpa [#allocation4], 0
    // Predicated region
    $region2: #{tpu_custom_call.1} parent=1 // pred_check
      _
    $region3: #{tpu_custom_call.1} parent=1 // pred_check_branch
      %16 = sbr.rel (0) target = $region5
    $region4: #{tpu_custom_call.1} parent=1 // pred_region
      _
    $region5: #{tpu_custom_call.1} parent=1 // pred_fallthru
      _
    // Predicated region
    $region6: #{tpu_custom_call.1} parent=1 // pred_check
      _
    $region7: #{tpu_custom_call.1} parent=1 // pred_check_branch
      %18 = sbr.rel (0) target = $region9
    $region8: #{tpu_custom_call.1} parent=1 // pred_region
      _
    $region9: #{tpu_custom_call.1} parent=1 // pred_fallthru
      _
    // Predicated region
    $region10: #{tpu_custom_call.1} parent=1 // pred_check
      _
    $region11: #{tpu_custom_call.1} parent=1 // pred_check_branch
      %20 = sbr.rel (0) target = $region13
    $region12: #{tpu_custom_call.1} parent=1 // pred_region
      _
    $region13: #{tpu_custom_call.1} parent=1 // pred_fallthru
      _
    // Predicated region
    $region14: #{tpu_custom_call.1} parent=1 // pred_check
      _
    $region15: #{tpu_custom_call.1} parent=1 // pred_check_branch
      %22 = sbr.rel (0) target = $region17
    $region16: #{tpu_custom_call.1} parent=1 // pred_region
      _
    $region17: #{tpu_custom_call.1} parent=1 // pred_fallthru
      _
    // Predicated region
    $region18: #{tpu_custom_call.1} parent=1 // pred_check
      _
    $region19: #{tpu_custom_call.1} parent=1 // pred_check_branch
      %24 = sbr.rel (0) target = $region21
    $region20: #{tpu_custom_call.1} parent=1 // pred_region
      _
    $region21: #{tpu_custom_call.1} parent=1 // pred_fallthru
      _
    // Predicated region
    $region22: #{tpu_custom_call.1} parent=1 // pred_check
      _
    $region23: #{tpu_custom_call.1} parent=1 // pred_check_branch
      %26 = sbr.rel (0) target = $region25
    $region24: #{tpu_custom_call.1} parent=1 // pred_region
      _
    $region25: #{tpu_custom_call.1} parent=1 // pred_fallthru
      _
    // Predicated region
    $region26: #{tpu_custom_call.1} parent=1 // pred_check
      _
    $region27: #{tpu_custom_call.1} parent=1 // pred_check_branch
      %28 = sbr.rel (0) target = $region29
    $region28: #{tpu_custom_call.1} parent=1 // pred_region
      _
    $region29: #{tpu_custom_call.1} parent=1 // pred_fallthru
      _
    %v29 = vld [vmem:[%s0] sm:$0x1]
    %v30 = vld [vmem:[%s1] sm:$0xff]
    %v31 = vld [vmem:[%s1 + $0x8] sm:$0x3]
    %33 = vset.pattern.permute.xlu0 0
    %34 = vperm.xlu0 %33, %v30
    %v35 = vpop.permute.xlu0 %34
    %38 = vset.pattern.permute.xlu0 0
    %39 = vperm.xlu0 %38, %v31
    %v40 = vpop.permute.xlu0 %39
    %v43 = vperm.slane %v29, 0
    %v45 = vmul.f32 %v35, %v43
    %v46 = vmul.f32 %v40, %v43
    %v47 = vld [vmem:[%s2] sm:$0xff]
    %v48 = vld [vmem:[%s2 + $0x8] sm:$0x3]
    %50 = vset.pattern.permute.xlu0 0
    %51 = vperm.xlu0 %50, %v47
    %v52 = vpop.permute.xlu0 %51
    %55 = vset.pattern.permute.xlu0 0
    %56 = vperm.xlu0 %55, %v48
    %v57 = vpop.permute.xlu0 %56
    %v59 = vadd.f32 %v45, %v52
    %v60 = vadd.f32 %v46, %v57
    %v61 = vmax.f32 %v59, 0.0
    %v62 = vmax.f32 %v60, 0.0
    %v63 = vld [vmem:[%s3] sm:$0xff]
    %v64 = vld [vmem:[%s3 + $0x8] sm:$0x3]
    %v65 = vld [vmem:[%s4] sm:$0xff]
    %v66 = vld [vmem:[%s4 + $0x8] sm:$0x3]
    %68 = vset.pattern.permute.xlu0 0
    %69 = vperm.xlu0 %68, %v65
    %v70 = vpop.permute.xlu0 %69
    %73 = vset.pattern.permute.xlu0 0
    %74 = vperm.xlu0 %73, %v66
    %v75 = vpop.permute.xlu0 %74
    %vm77 = vcmask 80896
    %v79 = vsel %vm77, %v63, 0
    %v82 = vsel %vm77, %v64, 0
    %vm84 = vcmask 1041408
    %v86 = vsel %vm84, %v62, 0
    %88 = vmatpush.msra.mxu0 0.0
    %89 = vmatpush.msra.mxu0 0.0
    %90 = vmatpush.msra.mxu0 0.0
    %91 = vmatpush.msra.mxu0 0.0
    %92 = vmatpush.msra.mxu0 0.0
    %93 = vmatpush.msra.mxu0 0.0
    %94 = vmatpush.msra.mxu0 0.0
    %95 = vmatpush.msra.mxu0 0.0
    %96 = vmatpush.msra.mxu0 0.0
    %97 = vmatpush.msra.mxu0 0.0
    %98 = vmatpush.msra.mxu0 0.0
    %99 = vmatpush.msra.mxu0 0.0
    %100 = vmatpush.msra.mxu0 0.0
    %101 = vmatpush.msra.mxu0 0.0
    %102 = vmatpush.msra.mxu0 %v86
    %103 = vmatpush.msra.mxu0 %v61
    %104 = vmatmul.f32.gmra.mxu0 %v79
    %v105 = vpop.f32.mrf.mxu0
    %v106 = vadd.f32 %v70, %v105
    %107 = vmatmul.f32.gmra.mxu0 %v82
    %v108 = vpop.f32.mrf.mxu0
    %v109 = vadd.f32 %v75, %v108
    %110 = vdwg.mxu0
    %v111 = vmax.f32 %v106, 0.0
    %v112 = vmax.f32 %v109, 0.0
    %v113 = vld [vmem:[%s5] sm:$0xff]
    %v114 = vld [vmem:[%s5 + $0x8] sm:$0x3]
    %116 = vset.pattern.permute.xlu0 0
    %117 = vperm.xlu0 %116, %v113
    %v118 = vpop.permute.xlu0 %117
    %121 = vset.pattern.permute.xlu0 0
    %122 = vperm.xlu0 %121, %v114
    %v123 = vpop.permute.xlu0 %122
    %v125 = vmul.f32 %v118, %v111
    %v126 = vmul.f32 %v123, %v112
    %v127 = vsel %vm84, %v126, 0.0
    %v128 = vadd.f32 %v125, %v127
    %v129 = vrot.slane %v128, 4
    %v130 = vadd.f32 %v128, %v129
    %v131 = vrot.slane %v130, 2
    %v132 = vadd.f32 %v130, %v131
    %v133 = vrot.slane %v132, 1
    %v134 = vadd.f32 %v132, %v133
    %v135 = vld [vmem:[#allocation2] sm:$0x1]
    %137 = vset.pattern.permute.xlu0 0
    %138 = vperm.xlu0 %137, %v135
    %v139 = vpop.permute.xlu0 %138
    %v141 = vperm.slane %v139, 0
    %v142 = vadd.f32 %v134, %v141
    %143 = vst [vmem:[#allocation3] sm:$0x1] %v142
    // Predicated region
    $region30: #{tpu_custom_call.1} parent=1 // pred_check
      _
    $region31: #{tpu_custom_call.1} parent=1 // pred_check_branch
      %145 = sbr.rel (0) target = $region33
    $region32: #{tpu_custom_call.1} parent=1 // pred_region
      %147 = vsyncadd [#allocation4], 0
      %s149 = sshll.u32 [#allocation3], 4
      %s150 = int_to_ptr.vmem [resolvable:$true] %s149
      %s151 = sshll.u32 %s7, 4
      %s152 = int_to_ptr.hbm [resolvable:$true] %s151
      %154 = dma.vmem_to_hbm [thread:$0]  %s150, 16, %s152, [#allocation4]
    $region33: #{tpu_custom_call.1} parent=1 // pred_fallthru
      _
    // Predicated region
    $region34: #{tpu_custom_call.1} parent=1 // pred_check
      _
    $region35: #{tpu_custom_call.1} parent=1 // pred_check_branch
      %156 = sbr.rel (0) target = $region37
    $region36: #{tpu_custom_call.1} parent=1 // pred_region
      %158 = dma.done [#allocation4], 16
    $region37: #{tpu_custom_call.1} parent=1 // pred_fallthru
      _
    %159 = vsyncpa [#allocation4], 1

</llo_original>
